<compile_context>
chip_gen: v7x
topology: tpu7x:2x2x1
jax: 0.10.0
libtpu: 0.0.40
codegen_flags: <defaults>
</compile_context>

<pallas_src>
import jax
import jax.numpy as jnp
from jax.experimental import pallas as pl
from jax.experimental.pallas import tpu as pltpu

KSIZE = 7
PAD = KSIZE // 2


def spatial_attention_kernel(bias_ref, k_ref, x_ref, o_ref):
    # bias_ref: SMEM (1,) f32          conv bias (scalar prefetch)
    # k_ref:    VMEM (2*HW, HW)        folded 7x7 conv matrix [avg rows ; max rows]
    # x_ref:    VMEM (TB, C, HW)       a block of TB images, spatials flattened
    # o_ref:    VMEM (TB, 1, HW)
    x = x_ref[...].astype(jnp.float32)                       # (TB, C, HW)
    avg = jnp.mean(x, axis=1)                                # (TB, HW)   sublane reduce
    mx = jnp.max(x, axis=1)                                  # (TB, HW)
    feat = jnp.concatenate([avg, mx], axis=-1)               # (TB, 2*HW) lane-dense
    acc = jnp.dot(feat.astype(k_ref.dtype), k_ref[...],
                  preferred_element_type=jnp.float32)        # single batched MXU matmul
    out = jax.nn.sigmoid(acc + bias_ref[0])                  # EUP sigmoid on whole block
    o_ref[...] = out.reshape(o_ref.shape).astype(o_ref.dtype)  # one lane-dense store


def _conv_matrix(weight, H, W, dtype=jnp.float32):
    """K_full[(c, y', x'), (y, x)] = w[c, y'-y+PAD, x'-x+PAD] (0 outside the 7x7 window),
    so concat([avg_flat, max_flat], -1) @ K_full reproduces the zero-padded 'same'
    7x7 conv of the 2-channel [avg; max] feature map."""
    w2 = jnp.asarray(weight).reshape(2, KSIZE, KSIZE).astype(jnp.float32)

    dy = jnp.arange(KSIZE)[:, None, None]
    y = jnp.arange(H)[None, :, None]
    i = jnp.arange(H)[None, None, :]
    A = (i == y + dy - PAD).astype(jnp.float32)              # (7, H, H): A[dy, y, i]

    j = jnp.arange(W)[:, None]
    xw = jnp.arange(W)[None, :]
    k = j - xw + PAD                                         # (W, W)
    valid = (k >= 0) & (k < KSIZE)
    kc = jnp.clip(k, 0, KSIZE - 1)
    B = jnp.where(valid[None, None], w2[:, :, kc], 0.0)      # (2, 7, W, W): B[c, dy, j, x]

    # out[y, x] = sum_{c,dy,i,j} A[dy,y,i] * feat_c[i,j] * B[c,dy,j,x]
    K = jnp.einsum("dyi,cdjx->cijyx", A, B)                  # (2, H, W, H, W)
    return K.reshape(2 * H * W, H * W).astype(dtype)


def _chip_tuning():
    """(vmem_limit_bytes, target input-block bytes, min grid steps) per TPU generation."""
    kind = ""
    try:
        kind = jax.devices()[0].device_kind.lower()
    except Exception:
        pass
    if "v5" in kind or "v6" in kind:
        # 128 MiB VMEM parts: large double-buffered blocks keep the HBM pipeline full.
        return 64 * 1024 * 1024, 8 << 20, 2
    # v7x (64 MiB VMEM per TC, 2 TCs) and unknown parts: conservative cap, >=4 steps.
    return 48 * 1024 * 1024, 4 << 20, 4


def _pick_batch_block(N, bytes_per_image, target_bytes, min_steps):
    """Largest divisor of N whose input block stays <= target_bytes while keeping at
    least min(min_steps, N) grid steps (so each TensorCore gets work and DMA overlaps)."""
    cap = max(1, target_bytes // max(bytes_per_image, 1))
    steps = max(1, min(min_steps, N))
    cap = min(cap, max(1, N // steps))
    tb = 1
    for d in range(1, N + 1):
        if N % d == 0 and d <= cap:
            tb = d
    return tb


def spatial_attention(x, weight, bias, *, batch_block=None):
    """x: (N, C, H, W); weight: (1, 2, 7, 7); bias: (1,). Returns (N, 1, H, W)."""
    N, C, H, W = x.shape
    HW = H * W
    if HW > 1024:
        # TODO(synk): for larger spatial maps switch to a factorized banded-conv path
        # (K_full is 8*HW^2 bytes, too big beyond ~32x32 spatials).
        raise NotImplementedError("spatial_attention kernel supports H*W <= 1024")

    vmem_limit, target_bytes, min_steps = _chip_tuning()
    if batch_block is None:
        batch_block = _pick_batch_block(N, C * HW * x.dtype.itemsize,
                                        target_bytes, min_steps)
    TB = batch_block
    if N % TB != 0:
        raise ValueError(f"batch_block={TB} must divide N={N}")

    mm_dtype = jnp.bfloat16 if x.dtype == jnp.bfloat16 else jnp.float32
    K = _conv_matrix(weight, H, W, dtype=mm_dtype)            # (2*HW, HW), <= 8 MiB
    b_sm = jnp.asarray(bias).reshape(1).astype(jnp.float32)
    x_flat = x.reshape(N, C, HW)                              # lane-dense last axis

    grid_spec = pltpu.PrefetchScalarGridSpec(
        num_scalar_prefetch=1,                                # bias -> SMEM
        grid=(N // TB,),
        in_specs=[
            # Constant block (same index every step): DMA'd once, stays resident.
            pl.BlockSpec((2 * HW, HW), lambda n, b: (0, 0)),
            pl.BlockSpec((TB, C, HW), lambda n, b: (n, 0, 0)),
        ],
        out_specs=pl.BlockSpec((TB, 1, HW), lambda n, b: (n, 0, 0)),
    )
    out = pl.pallas_call(
        spatial_attention_kernel,
        out_shape=jax.ShapeDtypeStruct((N, 1, HW), x.dtype),
        grid_spec=grid_spec,
        compiler_params=pltpu.CompilerParams(
            dimension_semantics=("parallel",),
            vmem_limit_bytes=vmem_limit,
        ),
    )(b_sm, K, x_flat)
    return out.reshape(N, 1, H, W)


def spatial_attention_ref(x, weight, bias):
    """Pure-JAX reference matching the PyTorch forward."""
    avg_out = jnp.mean(x, axis=1, keepdims=True)
    max_out = jnp.max(x, axis=1, keepdims=True)
    feat = jnp.concatenate([avg_out, max_out], axis=1)        # (N, 2, H, W)
    out = jax.lax.conv_general_dilated(
        feat, weight, window_strides=(1, 1),
        padding=((PAD, PAD), (PAD, PAD)),
        dimension_numbers=("NCHW", "OIHW", "NCHW"))
    return jax.nn.sigmoid(out + bias.reshape(1, 1, 1, 1))


if __name__ == "__main__":
    key = jax.random.PRNGKey(0)
    kx, kw, kb = jax.random.split(key, 3)

    N, C, H, W = 2, 4, 16, 16
    x = jax.random.normal(kx, (N, C, H, W), dtype=jnp.float32)

    # Conv2d(2, 1, 7, padding=3)-shaped parameters, deterministic init.
    fan_in = 2 * KSIZE * KSIZE
    bound = 1.0 / (fan_in ** 0.5)
    weight = jax.random.uniform(kw, (1, 2, KSIZE, KSIZE), jnp.float32, -bound, bound)
    bias = jax.random.uniform(kb, (1,), jnp.float32, -bound, bound)

    out = spatial_attention(x, weight, bias)
    out = jax.block_until_ready(out)

    ref = spatial_attention_ref(x, weight, bias)
    assert out.shape == (N, 1, H, W)
    assert jnp.allclose(out, ref, atol=1e-5, rtol=1e-5), "mismatch vs reference"
    print("KERNEL_OK")
</pallas_src>

<mosaic_0001>
module attributes {stable_mosaic.version = 11 : i64} {
  func.func @spatial_attention_kernel(%arg0: i32, %arg1: memref<1xf32, #tpu.memory_space<smem>>, %arg2: memref<512x256xf32, #tpu.memory_space<vmem>>, %arg3: memref<1x4x256xf32, #tpu.memory_space<vmem>>, %arg4: memref<1x1x256xf32, #tpu.memory_space<vmem>>) attributes {dimension_semantics = [#tpu.dimension_semantics<parallel>], iteration_bounds = array<i64: 2>, scalar_prefetch = 1 : i64, scratch_operands = 0 : i64, tpu.core_type = #tpu.core_type<tc>, window_params = [{pipeline_mode = #tpu.pipeline_mode<synchronous>, transform_indices = @transform_0, window_bounds = array<i64: 512, 256>}, {transform_indices = @transform_1, window_bounds = array<i64: 1, 4, 256>}, {transform_indices = @transform_2, window_bounds = array<i64: 1, 1, 256>}]} {
    %c0 = arith.constant 0 : index
    %c0_0 = arith.constant 0 : index
    %c0_1 = arith.constant 0 : index
    %0 = vector.load %arg3[%c0, %c0_0, %c0_1] : memref<1x4x256xf32, #tpu.memory_space<vmem>>, vector<1x4x256xf32>
    %cst = arith.constant dense<0.000000e+00> : vector<1x256xf32>
    %1 = vector.multi_reduction <add>, %0, %cst [1] : vector<1x4x256xf32> to vector<1x256xf32>
    %cst_2 = arith.constant 4.000000e+00 : f32
    %2 = vector.broadcast %cst_2 : f32 to vector<1x256xf32>
    %3 = arith.divf %1, %2 : vector<1x256xf32>
    %cst_3 = arith.constant dense<0xFF800000> : vector<1x256xf32>
    %4 = vector.multi_reduction <maximumf>, %0, %cst_3 [1] : vector<1x4x256xf32> to vector<1x256xf32>
    %5 = tpu.concatenate %3, %4 in 1 : vector<1x256xf32>, vector<1x256xf32> -> vector<1x512xf32>
    %c0_4 = arith.constant 0 : index
    %c0_5 = arith.constant 0 : index
    %6 = vector.load %arg2[%c0_4, %c0_5] : memref<512x256xf32, #tpu.memory_space<vmem>>, vector<512x256xf32>
    %cst_6 = arith.constant dense<0.000000e+00> : vector<1x256xf32>
    %7 = tpu.matmul %5, %6, %cst_6 {dimension_numbers = #tpu.dot_dimension_numbers<[1], [0], [0], [1], [0, 0, 1, 1], [], []>} : vector<1x512xf32>, vector<512x256xf32>, vector<1x256xf32> -> vector<1x256xf32>
    %c0_7 = arith.constant 0 : index
    %8 = memref.load %arg1[%c0_7] : memref<1xf32, #tpu.memory_space<smem>>
    %9 = vector.broadcast %8 : f32 to vector<1x256xf32>
    %10 = arith.addf %7, %9 : vector<1x256xf32>
    %11 = arith.negf %10 : vector<1x256xf32>
    %12 = math.exp %11 : vector<1x256xf32>
    %cst_8 = arith.constant 1.000000e+00 : f32
    %13 = vector.broadcast %cst_8 : f32 to vector<1x256xf32>
    %14 = arith.addf %13, %12 : vector<1x256xf32>
    %15 = arith.divf %13, %14 : vector<1x256xf32>
    %16 = vector.shape_cast %15 : vector<1x256xf32> to vector<1x1x256xf32>
    %c0_9 = arith.constant 0 : index
    %c0_10 = arith.constant 0 : index
    %c0_11 = arith.constant 0 : index
    %17 = vector.load %arg4[%c0_9, %c0_10, %c0_11] : memref<1x1x256xf32, #tpu.memory_space<vmem>>, vector<1x1x256xf32>
    tpu.vector_store %arg4[%c0_9, %c0_10, %c0_11], %16 {strides = array<i32>} : memref<1x1x256xf32, #tpu.memory_space<vmem>>, vector<1x1x256xf32>,
    return
  }
  func.func @transform_0(%arg0: i32, %arg1: memref<1xf32, #tpu.memory_space<smem>>) -> (i32, i32) {
    %c0_i32 = arith.constant 0 : i32
    %c0_i32_0 = arith.constant 0 : i32
    %c0_i32_1 = arith.constant 0 : i32
    return %c0_i32, %c0_i32_0 : i32, i32
  }
  func.func @transform_1(%arg0: i32, %arg1: memref<1xf32, #tpu.memory_space<smem>>) -> (i32, i32, i32) {
    %c0_i32 = arith.constant 0 : i32
    %c0_i32_0 = arith.constant 0 : i32
    %c0_i32_1 = arith.constant 0 : i32
    return %arg0, %c0_i32, %c0_i32_0 : i32, i32, i32
  }
  func.func @transform_2(%arg0: i32, %arg1: memref<1xf32, #tpu.memory_space<smem>>) -> (i32, i32, i32) {
    %c0_i32 = arith.constant 0 : i32
    %c0_i32_0 = arith.constant 0 : i32
    %c0_i32_1 = arith.constant 0 : i32
    return %arg0, %c0_i32, %c0_i32_0 : i32, i32, i32
  }
}

</mosaic_0001>

<llo_original>
// kernel: tpu_custom_call.1
$region0: #{tpu_custom_call.1}
  #allocation0 [shape = 'u32[]', space=smem, size = 0x4, offset = 0x4, fixed_abs, tag = 'smem constant byte address 0x4 - core index']
  #allocation1 [shape = 'u32[144,128]{1,0:T(1,128)}', space=vmem, size = 0x12000, scoped, tag = 'internal scratch']
  #allocation2 [shape = 's32[1]{0}', space=sflag, size = 0x4, scoped, tag = 'scoped memory for tpu_custom_call.1']
  #allocation3 [shape = 'f32[1]{0:T(128)S(6)}', space=smem, size = 0x200, scoped, tag = 'prefetched SMEM operand 0']
  %s0 = inlined_call_operand.<no memory space> [shape: f32[1], index: 0, kind: input, shape index: {}]
  %s1 = inlined_call_operand.hbm [shape: f32[512,256], index: 1, kind: input, shape index: {}]
  %s2 = inlined_call_operand.hbm [shape: f32[2,4,256], index: 2, kind: input, shape index: {}]
  %s3 = inlined_call_operand.hbm [shape: f32[2,1,256], index: 3, kind: output, shape index: {}]
  %s4 = sld [smem:[#allocation0]]
  $region49: #{tpu_custom_call.1} parent=0
    _
  %s6 = ssub.s32 1, %s4
  %s7 = scalar_select 0, %s6, %s4
  %8 = sst [smem:[#allocation3]] %s0
  $region1: #{tpu_custom_call.1} parent=0
    #allocation4 [shape = 'u8[524288]{0}', space=vmem, size = 0x80000, scoped, tag = 'input window, operand 1, single buffered']
    #allocation5 [shape = 's32[2]{0}', space=sflag, size = 0x8, scoped, tag = 'scoped memory for tpu_custom_call.1']
    #allocation6 [shape = 's32[2]{0}', space=sflag, size = 0x8, scoped, tag = 'scoped memory for tpu_custom_call.1']
    #allocation7 [shape = 'u8[8192]{0}', space=vmem, size = 0x2000, scoped, tag = 'input window, operand 2']
    #allocation8 [shape = 's32[2]{0}', space=sflag, size = 0x8, scoped, tag = 'scoped memory for tpu_custom_call.1']
    #allocation9 [shape = 'u8[2048]{0}', space=vmem, size = 0x800, scoped, tag = 'output window, operand 0']
    %9 = vsyncpa [#allocation5], 0
    %10 = vsyncpa [#allocation8], 0
    %s11 = scalar_lea.sflag [#allocation8], 1
    %12 = vsyncpa %s11, 0
    %13 = vsyncpa [#allocation6], 0
    %s14 = scalar_lea.sflag [#allocation6], 1
    %15 = vsyncpa %s14, 0
    loop: start=0, step=1, limit=4
    $region2: #{tpu_custom_call.1} parent=1 // loop_pre_header
      _
    $region3: #{tpu_custom_call.1} parent=1 // loop_header
      %s17 = sphi 0, %s21
      %p18 = scmp.ge.s32.totalorder %s17, 4
      %s25 = sphi 0, %s25
      %s27 = sphi 0, %s25
      %s28 = sphi 0, %s27
      %s42 = sphi 0, %s28
      %s48 = sphi 0, %s50
      %s51 = sphi 0, %s48
      %s52 = sphi 0, %s51
      %s68 = sphi 0, %s52
      %s74 = sphi 0, %s76
      %s77 = sphi 0, %s74
      %s78 = sphi 0, %s77
      %s94 = sphi 0, %s78
    $region4: #{tpu_custom_call.1} parent=1 // loop_header_branch
      %20 = sbr.rel (%p18) target = $region8
    $region5: #{tpu_custom_call.1} parent=1 // loop_body
      %s22 = ssub.s32 %s17, 1
      %s23 = ssub.s32 %s17, 2
      %s24 = sadd.s32 %s17, 1
      %s26 = sadd.s32 %s25, 1
      %p29 = scmp.eq.s32.totalorder %s17, 1
      %p30 = scmp.ne.s32.totalorder %s25, %s27
      %p31 = scmp.eq.s32.totalorder %s17, 0
      %p32 = por %p30, %p31
      %p33 = scmp.ne.s32.totalorder %s25, %s27
      %p34 = scmp.eq.s32.totalorder %s22, 1
      %p35 = por %p33, %p34
      %p36 = scmp.ne.s32.totalorder %s27, %s28
      %p37 = scmp.eq.s32.totalorder %s22, 0
      %p38 = por %p36, %p37
      %p39 = scmp.ne.s32.totalorder %s27, %s28
      %p40 = scmp.eq.s32.totalorder %s23, 1
      %p41 = por %p39, %p40
      %p43 = scmp.ne.s32.totalorder %s28, %s42
      %p44 = scmp.eq.s32.totalorder %s23, 0
      %p45 = por %p43, %p44
      %s46 = ssub.s32 %s17, %s24
      %p47 = scmp.eq.s32.totalorder %s46, 0
      %s49 = sadd.s32 %s48, 1
      %s50 = scalar_select %p47, %s48, %s49
      %p53 = pneg %p47
      %p54 = scmp.eq.s32.totalorder %s17, 1
      %p55 = por %p53, %p54
      %p56 = scmp.ne.s32.totalorder %s48, %s51
      %p57 = scmp.eq.s32.totalorder %s17, 0
      %p58 = por %p56, %p57
      %p59 = scmp.ne.s32.totalorder %s48, %s51
      %p60 = scmp.eq.s32.totalorder %s22, 1
      %p61 = por %p59, %p60
      %p62 = scmp.ne.s32.totalorder %s51, %s52
      %p63 = scmp.eq.s32.totalorder %s22, 0
      %p64 = por %p62, %p63
      %p65 = scmp.ne.s32.totalorder %s51, %s52
      %p66 = scmp.eq.s32.totalorder %s23, 1
      %p67 = por %p65, %p66
      %p69 = scmp.ne.s32.totalorder %s52, %s68
      %p70 = scmp.eq.s32.totalorder %s23, 0
      %p71 = por %p69, %p70
      %s72 = ssub.s32 %s17, %s24
      %p73 = scmp.eq.s32.totalorder %s72, 0
      %s75 = sadd.s32 %s74, 1
      %s76 = scalar_select %p73, %s74, %s75
      %p79 = pneg %p73
      %p80 = scmp.eq.s32.totalorder %s17, 1
      %p81 = por %p79, %p80
      %p82 = scmp.ne.s32.totalorder %s74, %s77
      %p83 = scmp.eq.s32.totalorder %s17, 0
      %p84 = por %p82, %p83
      %p85 = scmp.ne.s32.totalorder %s74, %s77
      %p86 = scmp.eq.s32.totalorder %s22, 1
      %p87 = por %p85, %p86
      %p88 = scmp.ne.s32.totalorder %s77, %s78
      %p89 = scmp.eq.s32.totalorder %s22, 0
      %p90 = por %p88, %p89
      %p91 = scmp.ne.s32.totalorder %s77, %s78
      %p92 = scmp.eq.s32.totalorder %s23, 1
      %p93 = por %p91, %p92
      %p95 = scmp.ne.s32.totalorder %s78, %s94
      %p96 = scmp.eq.s32.totalorder %s23, 0
      %p97 = por %p95, %p96
      %p98 = scmp.le.s32.totalorder 1, %s17
      %p99 = scmp.lt.s32.totalorder %s17, 3
      %p100 = pnand %p98, %p99
      %p101 = pneg %p100
      // Predicated region
      $region9: #{tpu_custom_call.1} parent=5 // pred_check
        _
      $region10: #{tpu_custom_call.1} parent=5 // pred_check_branch
        %103 = sbr.rel (%p100) target = $region12
      $region11: #{tpu_custom_call.1} parent=5 // pred_region
        %s104 = ssub.s32 %s17, 1
        // Predicated region
        $region13: #{tpu_custom_call.1} parent=11 // pred_check
          %p105 = pneg %p38
        $region14: #{tpu_custom_call.1} parent=11 // pred_check_branch
          %107 = sbr.rel (%p105) target = $region16
        $region15: #{tpu_custom_call.1} parent=11 // pred_region
          %s109 = ssub.s32 16384, 16384
          %110 = vsyncadd [#allocation5], %s109
          %s111 = sshll.u32 [#allocation4], 4
          %s112 = int_to_ptr.vmem [resolvable:$true] %s111
          %117 = dma.hbm_to_vmem [thread:$0]  %s1, 16384, %s112, [#allocation5], 256, 256, 16
        $region16: #{tpu_custom_call.1} parent=11 // pred_fallthru
          _
      $region12: #{tpu_custom_call.1} parent=5 // pred_fallthru
        _
      %p118 = scmp.lt.s32.totalorder %s17, 2
      // Predicated region
      $region17: #{tpu_custom_call.1} parent=5 // pred_check
        %p119 = pneg %p118
      $region18: #{tpu_custom_call.1} parent=5 // pred_check_branch
        %121 = sbr.rel (%p119) target = $region20
      $region19: #{tpu_custom_call.1} parent=5 // pred_region
        // Predicated region
        $region21: #{tpu_custom_call.1} parent=19 // pred_check
          %p122 = pneg %p58
        $region22: #{tpu_custom_call.1} parent=19 // pred_check_branch
          %124 = sbr.rel (%p122) target = $region24
        $region23: #{tpu_custom_call.1} parent=19 // pred_region
          %s125 = sand.u32 %s48, 1
          %s126 = scalar_lea.sflag [#allocation8], %s125
          %s127 = sand.u32 %s48, 1
          %s128 = smul.addr %s127, 8
          %s129 = scalar_lea.vmem [#allocation7], %s128
          %s131 = ssub.s32 128, 128
          %132 = vsyncadd %s126, %s131
          %s133 = smul.addr %s17, 2
          %s134 = smul.addr %s133, 64
          %s135 = scalar_lea.hbm %s2, %s134
          %s137 = sshll.u32 %s129, 4
          %s138 = int_to_ptr.vmem [resolvable:$true] %s137
          %140 = dma.hbm_to_vmem [thread:$0]  %s135, 128, %s138, %s126
        $region24: #{tpu_custom_call.1} parent=19 // pred_fallthru
          _
      $region20: #{tpu_custom_call.1} parent=5 // pred_fallthru
        _
      %p141 = scmp.le.s32.totalorder 1, %s17
      %p142 = scmp.lt.s32.totalorder %s17, 3
      %p143 = pnand %p141, %p142
      %p144 = pneg %p143
      // Predicated region
      $region25: #{tpu_custom_call.1} parent=5 // pred_check
        _
      $region26: #{tpu_custom_call.1} parent=5 // pred_check_branch
        %146 = sbr.rel (%p143) target = $region28
      $region27: #{tpu_custom_call.1} parent=5 // pred_region
        %s147 = ssub.s32 %s17, 1
        // Predicated region
        $region29: #{tpu_custom_call.1} parent=27 // pred_check
          %p148 = pneg %p38
        $region30: #{tpu_custom_call.1} parent=27 // pred_check_branch
          %150 = sbr.rel (%p148) target = $region32
        $region31: #{tpu_custom_call.1} parent=27 // pred_region
          %151 = dma.done [#allocation5], 16384
        $region32: #{tpu_custom_call.1} parent=27 // pred_fallthru
          _
        %s152 = sand.u32 %s51, 1
        %s153 = scalar_lea.sflag [#allocation8], %s152
        %s154 = sand.u32 %s51, 1
        %s155 = smul.addr %s154, 8
        %s156 = scalar_lea.vmem [#allocation7], %s155
        // Predicated region
        $region33: #{tpu_custom_call.1} parent=27 // pred_check
          %p157 = pneg %p64
        $region34: #{tpu_custom_call.1} parent=27 // pred_check_branch
          %159 = sbr.rel (%p157) target = $region36
        $region35: #{tpu_custom_call.1} parent=27 // pred_region
          %160 = dma.done %s153, 128
        $region36: #{tpu_custom_call.1} parent=27 // pred_fallthru
          _
        %p161 = pneg %p38
        %p162 = pneg %p35
        %s163 = sand.u32 %s51, 1
        %s164 = scalar_lea.sflag [#allocation8], %s163
        %s165 = sand.u32 %s51, 1
        %s166 = smul.addr %s165, 8
        %s167 = scalar_lea.vmem [#allocation7], %s166
        %p168 = pneg %p64
        %p169 = pneg %p61
        %p170 = pneg %p90
        %p171 = pneg %p87
        %s172 = sand.u32 %s77, 1
        %s173 = scalar_lea.sflag [#allocation6], %s172
        %s174 = sand.u32 %s77, 1
        %s175 = smul.addr %s174, 2
        %s176 = scalar_lea.vmem [#allocation9], %s175
        %v177 = vld [vmem:[%s156] sm:$0xff]
        %v179 = vcombine.high %v177, %v177
        %vm181 = vcmask 1043456
        %v182 = vsel %vm181, %v177, 0.0
        %v183 = vrot.slane %v182, 4
        %v184 = vadd.f32 %v182, %v183
        %v185 = vrot.slane %v184, 2
        %v186 = vadd.f32 %v184, %v185
        %v187 = vrot.slane %v186, 1
        %v188 = vadd.f32 %v186, %v187
        %v189 = vsel %vm181, %v179, 0.0
        %v190 = vrot.slane %v189, 4
        %v191 = vadd.f32 %v189, %v190
        %v192 = vrot.slane %v191, 2
        %v193 = vadd.f32 %v191, %v192
        %v194 = vrot.slane %v193, 1
        %v195 = vadd.f32 %v193, %v194
        %v196 = vrcp.pop 4.0
        %v197 = vmul.f32 %v188, %v196
        %v198 = vmul.f32 %v195, %v196
        %v199 = vsel %vm181, %v177, -inf
        %v200 = vrot.slane %v199, 4
        %v201 = vmax.f32 %v199, %v200
        %v202 = vrot.slane %v201, 2
        %v203 = vmax.f32 %v201, %v202
        %v204 = vrot.slane %v203, 1
        %v205 = vmax.f32 %v203, %v204
        %v206 = vsel %vm181, %v179, -inf
        %v207 = vrot.slane %v206, 4
        %v208 = vmax.f32 %v206, %v207
        %v209 = vrot.slane %v208, 2
        %v210 = vmax.f32 %v208, %v209
        %v211 = vrot.slane %v210, 1
        %v212 = vmax.f32 %v210, %v211
        %v213 = vld [vmem:[#allocation4] sm:$0xff]
        %v214 = vld [vmem:[#allocation4 + $0x8] sm:$0xff]
        %v215 = vld [vmem:[#allocation4 + $0x10] sm:$0xff]
        %v216 = vld [vmem:[#allocation4 + $0x18] sm:$0xff]
        %v217 = vld [vmem:[#allocation4 + $0x20] sm:$0xff]
        %v218 = vld [vmem:[#allocation4 + $0x28] sm:$0xff]
        %v219 = vld [vmem:[#allocation4 + $0x30] sm:$0xff]
        %v220 = vld [vmem:[#allocation4 + $0x38] sm:$0xff]
        %v221 = vld [vmem:[#allocation4 + $0x40] sm:$0xff]
        %v222 = vld [vmem:[#allocation4 + $0x48] sm:$0xff]
        %v223 = vld [vmem:[#allocation4 + $0x50] sm:$0xff]
        %v224 = vld [vmem:[#allocation4 + $0x58] sm:$0xff]
        %v225 = vld [vmem:[#allocation4 + $0x60] sm:$0xff]
        %v226 = vld [vmem:[#allocation4 + $0x68] sm:$0xff]
        %v227 = vld [vmem:[#allocation4 + $0x70] sm:$0xff]
        %v228 = vld [vmem:[#allocation4 + $0x78] sm:$0xff]
        %v229 = vld [vmem:[#allocation4 + $0x80] sm:$0xff]
        %v230 = vld [vmem:[#allocation4 + $0x88] sm:$0xff]
        %v231 = vld [vmem:[#allocation4 + $0x90] sm:$0xff]
        %v232 = vld [vmem:[#allocation4 + $0x98] sm:$0xff]
        %v233 = vld [vmem:[#allocation4 + $0xa0] sm:$0xff]
        %v234 = vld [vmem:[#allocation4 + $0xa8] sm:$0xff]
        %v235 = vld [vmem:[#allocation4 + $0xb0] sm:$0xff]
        %v236 = vld [vmem:[#allocation4 + $0xb8] sm:$0xff]
        %v237 = vld [vmem:[#allocation4 + $0xc0] sm:$0xff]
        %v238 = vld [vmem:[#allocation4 + $0xc8] sm:$0xff]
        %v239 = vld [vmem:[#allocation4 + $0xd0] sm:$0xff]
        %v240 = vld [vmem:[#allocation4 + $0xd8] sm:$0xff]
        %v241 = vld [vmem:[#allocation4 + $0xe0] sm:$0xff]
        %v242 = vld [vmem:[#allocation4 + $0xe8] sm:$0xff]
        %v243 = vld [vmem:[#allocation4 + $0xf0] sm:$0xff]
        %v244 = vld [vmem:[#allocation4 + $0xf8] sm:$0xff]
        %v245 = vld [vmem:[#allocation4 + $0x100] sm:$0xff]
        %v246 = vld [vmem:[#allocation4 + $0x108] sm:$0xff]
        %v247 = vld [vmem:[#allocation4 + $0x110] sm:$0xff]
        %v248 = vld [vmem:[#allocation4 + $0x118] sm:$0xff]
        %v249 = vld [vmem:[#allocation4 + $0x120] sm:$0xff]
        %v250 = vld [vmem:[#allocation4 + $0x128] sm:$0xff]
        %v251 = vld [vmem:[#allocation4 + $0x130] sm:$0xff]
        %v252 = vld [vmem:[#allocation4 + $0x138] sm:$0xff]
        %v253 = vld [vmem:[#allocation4 + $0x140] sm:$0xff]
        %v254 = vld [vmem:[#allocation4 + $0x148] sm:$0xff]
        %v255 = vld [vmem:[#allocation4 + $0x150] sm:$0xff]
        %v256 = vld [vmem:[#allocation4 + $0x158] sm:$0xff]
        %v257 = vld [vmem:[#allocation4 + $0x160] sm:$0xff]
        %v258 = vld [vmem:[#allocation4 + $0x168] sm:$0xff]
        %v259 = vld [vmem:[#allocation4 + $0x170] sm:$0xff]
        %v260 = vld [vmem:[#allocation4 + $0x178] sm:$0xff]
        %v261 = vld [vmem:[#allocation4 + $0x180] sm:$0xff]
        %v262 = vld [vmem:[#allocation4 + $0x188] sm:$0xff]
        %v263 = vld [vmem:[#allocation4 + $0x190] sm:$0xff]
        %v264 = vld [vmem:[#allocation4 + $0x198] sm:$0xff]
        %v265 = vld [vmem:[#allocation4 + $0x1a0] sm:$0xff]
        %v266 = vld [vmem:[#allocation4 + $0x1a8] sm:$0xff]
        %v267 = vld [vmem:[#allocation4 + $0x1b0] sm:$0xff]
        %v268 = vld [vmem:[#allocation4 + $0x1b8] sm:$0xff]
        %v269 = vld [vmem:[#allocation4 + $0x1c0] sm:$0xff]
        %v270 = vld [vmem:[#allocation4 + $0x1c8] sm:$0xff]
        %v271 = vld [vmem:[#allocation4 + $0x1d0] sm:$0xff]
        %v272 = vld [vmem:[#allocation4 + $0x1d8] sm:$0xff]
        %v273 = vld [vmem:[#allocation4 + $0x1e0] sm:$0xff]
        %v274 = vld [vmem:[#allocation4 + $0x1e8] sm:$0xff]
        %v275 = vld [vmem:[#allocation4 + $0x1f0] sm:$0xff]
        %v276 = vld [vmem:[#allocation4 + $0x1f8] sm:$0xff]
        %v277 = vld [vmem:[#allocation4 + $0x200] sm:$0xff]
        %v278 = vld [vmem:[#allocation4 + $0x208] sm:$0xff]
        %v279 = vld [vmem:[#allocation4 + $0x210] sm:$0xff]
        %v280 = vld [vmem:[#allocation4 + $0x218] sm:$0xff]
        %v281 = vld [vmem:[#allocation4 + $0x220] sm:$0xff]
        %v282 = vld [vmem:[#allocation4 + $0x228] sm:$0xff]
        %v283 = vld [vmem:[#allocation4 + $0x230] sm:$0xff]
        %v284 = vld [vmem:[#allocation4 + $0x238] sm:$0xff]
        %v285 = vld [vmem:[#allocation4 + $0x240] sm:$0xff]
        %v286 = vld [vmem:[#allocation4 + $0x248] sm:$0xff]
        %v287 = vld [vmem:[#allocation4 + $0x250] sm:$0xff]
        %v288 = vld [vmem:[#allocation4 + $0x258] sm:$0xff]
        %v289 = vld [vmem:[#allocation4 + $0x260] sm:$0xff]
        %v290 = vld [vmem:[#allocation4 + $0x268] sm:$0xff]
        %v291 = vld [vmem:[#allocation4 + $0x270] sm:$0xff]
        %v292 = vld [vmem:[#allocation4 + $0x278] sm:$0xff]
        %v293 = vld [vmem:[#allocation4 + $0x280] sm:$0xff]
        %v294 = vld [vmem:[#allocation4 + $0x288] sm:$0xff]
        %v295 = vld [vmem:[#allocation4 + $0x290] sm:$0xff]
        %v296 = vld [vmem:[#allocation4 + $0x298] sm:$0xff]
        %v297 = vld [vmem:[#allocation4 + $0x2a0] sm:$0xff]
        %v298 = vld [vmem:[#allocation4 + $0x2a8] sm:$0xff]
        %v299 = vld [vmem:[#allocation4 + $0x2b0] sm:$0xff]
        %v300 = vld [vmem:[#allocation4 + $0x2b8] sm:$0xff]
        %v301 = vld [vmem:[#allocation4 + $0x2c0] sm:$0xff]
        %v302 = vld [vmem:[#allocation4 + $0x2c8] sm:$0xff]
        %v303 = vld [vmem:[#allocation4 + $0x2d0] sm:$0xff]
        %v304 = vld [vmem:[#allocation4 + $0x2d8] sm:$0xff]
        %v305 = vld [vmem:[#allocation4 + $0x2e0] sm:$0xff]
        %v306 = vld [vmem:[#allocation4 + $0x2e8] sm:$0xff]
        %v307 = vld [vmem:[#allocation4 + $0x2f0] sm:$0xff]
        %v308 = vld [vmem:[#allocation4 + $0x2f8] sm:$0xff]
        %v309 = vld [vmem:[#allocation4 + $0x300] sm:$0xff]
        %v310 = vld [vmem:[#allocation4 + $0x308] sm:$0xff]
        %v311 = vld [vmem:[#allocation4 + $0x310] sm:$0xff]
        %v312 = vld [vmem:[#allocation4 + $0x318] sm:$0xff]
        %v313 = vld [vmem:[#allocation4 + $0x320] sm:$0xff]
        %v314 = vld [vmem:[#allocation4 + $0x328] sm:$0xff]
        %v315 = vld [vmem:[#allocation4 + $0x330] sm:$0xff]
        %v316 = vld [vmem:[#allocation4 + $0x338] sm:$0xff]
        %v317 = vld [vmem:[#allocation4 + $0x340] sm:$0xff]
        %v318 = vld [vmem:[#allocation4 + $0x348] sm:$0xff]
        %v319 = vld [vmem:[#allocation4 + $0x350] sm:$0xff]
        %v320 = vld [vmem:[#allocation4 + $0x358] sm:$0xff]
        %v321 = vld [vmem:[#allocation4 + $0x360] sm:$0xff]
        %v322 = vld [vmem:[#allocation4 + $0x368] sm:$0xff]
        %v323 = vld [vmem:[#allocation4 + $0x370] sm:$0xff]
        %v324 = vld [vmem:[#allocation4 + $0x378] sm:$0xff]
        %v325 = vld [vmem:[#allocation4 + $0x380] sm:$0xff]
        %v326 = vld [vmem:[#allocation4 + $0x388] sm:$0xff]
        %v327 = vld [vmem:[#allocation4 + $0x390] sm:$0xff]
        %v328 = vld [vmem:[#allocation4 + $0x398] sm:$0xff]
        %v329 = vld [vmem:[#allocation4 + $0x3a0] sm:$0xff]
        %v330 = vld [vmem:[#allocation4 + $0x3a8] sm:$0xff]
        %v331 = vld [vmem:[#allocation4 + $0x3b0] sm:$0xff]
        %v332 = vld [vmem:[#allocation4 + $0x3b8] sm:$0xff]
        %v333 = vld [vmem:[#allocation4 + $0x3c0] sm:$0xff]
        %v334 = vld [vmem:[#allocation4 + $0x3c8] sm:$0xff]
        %v335 = vld [vmem:[#allocation4 + $0x3d0] sm:$0xff]
        %v336 = vld [vmem:[#allocation4 + $0x3d8] sm:$0xff]
        %v337 = vld [vmem:[#allocation4 + $0x3e0] sm:$0xff]
        %v338 = vld [vmem:[#allocation4 + $0x3e8] sm:$0xff]
        %v339 = vld [vmem:[#allocation4 + $0x3f0] sm:$0xff]
        %v340 = vld [vmem:[#allocation4 + $0x3f8] sm:$0xff]
        %s341 = sld [smem:[#allocation3]]
        %v342 = vstv %s341
        %343 = vmatprep.subr.mxu0 %v214
        %344 = vmatpush1.msra.mxu0 %v213
        %345 = vmatprep.subr.mxu0 %v216
        %346 = vmatpush1.msra.mxu0 %v215
        %347 = vmatprep.subr.mxu0 %v218
        %348 = vmatpush1.msra.mxu0 %v217
        %349 = vmatprep.subr.mxu0 %v220
        %350 = vmatpush1.msra.mxu0 %v219
        %351 = vmatprep.subr.mxu0 %v222
        %352 = vmatpush1.msra.mxu0 %v221
        %353 = vmatprep.subr.mxu0 %v224
        %354 = vmatpush1.msra.mxu0 %v223
        %355 = vmatprep.subr.mxu0 %v226
        %356 = vmatpush1.msra.mxu0 %v225
        %357 = vmatprep.subr.mxu0 %v228
        %358 = vmatpush1.msra.mxu0 %v227
        %359 = vmatprep.subr.mxu0 %v230
        %360 = vmatpush1.msra.mxu0 %v229
        %361 = vmatprep.subr.mxu0 %v232
        %362 = vmatpush1.msra.mxu0 %v231
        %363 = vmatprep.subr.mxu0 %v234
        %364 = vmatpush1.msra.mxu0 %v233
        %365 = vmatprep.subr.mxu0 %v236
        %366 = vmatpush1.msra.mxu0 %v235
        %367 = vmatprep.subr.mxu0 %v238
        %368 = vmatpush1.msra.mxu0 %v237
        %369 = vmatprep.subr.mxu0 %v240
        %370 = vmatpush1.msra.mxu0 %v239
        %371 = vmatprep.subr.mxu0 %v242
        %372 = vmatpush1.msra.mxu0 %v241
        %373 = vmatprep.subr.mxu0 %v244
        %374 = vmatpush1.msra.mxu0 %v243
        %375 = vmatprep.subr.mxu0 %v246
        %376 = vmatpush1.msra.mxu0 %v245
        %377 = vmatprep.subr.mxu0 %v248
        %378 = vmatpush1.msra.mxu0 %v247
        %379 = vmatprep.subr.mxu0 %v250
        %380 = vmatpush1.msra.mxu0 %v249
        %381 = vmatprep.subr.mxu0 %v252
        %382 = vmatpush1.msra.mxu0 %v251
        %383 = vmatprep.subr.mxu0 %v254
        %384 = vmatpush1.msra.mxu0 %v253
        %385 = vmatprep.subr.mxu0 %v256
        %386 = vmatpush1.msra.mxu0 %v255
        %387 = vmatprep.subr.mxu0 %v258
        %388 = vmatpush1.msra.mxu0 %v257
        %389 = vmatprep.subr.mxu0 %v260
        %390 = vmatpush1.msra.mxu0 %v259
        %391 = vmatprep.subr.mxu0 %v262
        %392 = vmatpush1.msra.mxu0 %v261
        %393 = vmatprep.subr.mxu0 %v264
        %394 = vmatpush1.msra.mxu0 %v263
        %395 = vmatprep.subr.mxu0 %v266
        %396 = vmatpush1.msra.mxu0 %v265
        %397 = vmatprep.subr.mxu0 %v268
        %398 = vmatpush1.msra.mxu0 %v267
        %399 = vmatprep.subr.mxu0 %v270
        %400 = vmatpush1.msra.mxu0 %v269
        %401 = vmatprep.subr.mxu0 %v272
        %402 = vmatpush1.msra.mxu0 %v271
        %403 = vmatprep.subr.mxu0 %v274
        %404 = vmatpush1.msra.mxu0 %v273
        %405 = vmatprep.subr.mxu0 %v276
        %406 = vmatpush1.msra.mxu0 %v275
        %407 = vmatprep.mubr.f32.mxu0 %v198
        %408 = vmatmul.mubr.f32.gmra.mrb[0].mxu0 %v197
        %v409 = vpop.f32.mrb[0].mxu0
        %v410 = vadd.f32 %v342, %v409
        %v411 = vpop.f32.mrb[0].mxu0
        %v412 = vadd.f32 %v342, %v411
        %413 = vdwg.mxu0
        %414 = vmatprep.subr.mxu0 %v278
        %415 = vmatpush1.msra.mxu0 %v277
        %416 = vmatprep.subr.mxu0 %v280
        %417 = vmatpush1.msra.mxu0 %v279
        %418 = vmatprep.subr.mxu0 %v282
        %419 = vmatpush1.msra.mxu0 %v281
        %420 = vmatprep.subr.mxu0 %v284
        %421 = vmatpush1.msra.mxu0 %v283
        %422 = vmatprep.subr.mxu0 %v286
        %423 = vmatpush1.msra.mxu0 %v285
        %424 = vmatprep.subr.mxu0 %v288
        %425 = vmatpush1.msra.mxu0 %v287
        %426 = vmatprep.subr.mxu0 %v290
        %427 = vmatpush1.msra.mxu0 %v289
        %428 = vmatprep.subr.mxu0 %v292
        %429 = vmatpush1.msra.mxu0 %v291
        %430 = vmatprep.subr.mxu0 %v294
        %431 = vmatpush1.msra.mxu0 %v293
        %432 = vmatprep.subr.mxu0 %v296
        %433 = vmatpush1.msra.mxu0 %v295
        %434 = vmatprep.subr.mxu0 %v298
        %435 = vmatpush1.msra.mxu0 %v297
        %436 = vmatprep.subr.mxu0 %v300
        %437 = vmatpush1.msra.mxu0 %v299
        %438 = vmatprep.subr.mxu0 %v302
        %439 = vmatpush1.msra.mxu0 %v301
        %440 = vmatprep.subr.mxu0 %v304
        %441 = vmatpush1.msra.mxu0 %v303
        %442 = vmatprep.subr.mxu0 %v306
        %443 = vmatpush1.msra.mxu0 %v305
        %444 = vmatprep.subr.mxu0 %v308
        %445 = vmatpush1.msra.mxu0 %v307
        %446 = vmatprep.subr.mxu0 %v310
        %447 = vmatpush1.msra.mxu0 %v309
        %448 = vmatprep.subr.mxu0 %v312
        %449 = vmatpush1.msra.mxu0 %v311
        %450 = vmatprep.subr.mxu0 %v314
        %451 = vmatpush1.msra.mxu0 %v313
        %452 = vmatprep.subr.mxu0 %v316
        %453 = vmatpush1.msra.mxu0 %v315
        %454 = vmatprep.subr.mxu0 %v318
        %455 = vmatpush1.msra.mxu0 %v317
        %456 = vmatprep.subr.mxu0 %v320
        %457 = vmatpush1.msra.mxu0 %v319
        %458 = vmatprep.subr.mxu0 %v322
        %459 = vmatpush1.msra.mxu0 %v321
        %460 = vmatprep.subr.mxu0 %v324
        %461 = vmatpush1.msra.mxu0 %v323
        %462 = vmatprep.subr.mxu0 %v326
        %463 = vmatpush1.msra.mxu0 %v325
        %464 = vmatprep.subr.mxu0 %v328
        %465 = vmatpush1.msra.mxu0 %v327
        %466 = vmatprep.subr.mxu0 %v330
        %467 = vmatpush1.msra.mxu0 %v329
        %468 = vmatprep.subr.mxu0 %v332
        %469 = vmatpush1.msra.mxu0 %v331
        %470 = vmatprep.subr.mxu0 %v334
        %471 = vmatpush1.msra.mxu0 %v333
        %472 = vmatprep.subr.mxu0 %v336
        %473 = vmatpush1.msra.mxu0 %v335
        %474 = vmatprep.subr.mxu0 %v338
        %475 = vmatpush1.msra.mxu0 %v337
        %476 = vmatprep.subr.mxu0 %v340
        %477 = vmatpush1.msra.mxu0 %v339
        %478 = vmatprep.mubr.f32.mxu0 %v212
        %479 = vmatmul.mubr.f32.gmra.mrb[0].mxu0 %v205
        %v480 = vpop.f32.mrb[0].mxu0
        %v481 = vadd.f32 %v410, %v480
        %v482 = vpop.f32.mrb[0].mxu0
        %v483 = vadd.f32 %v412, %v482
        %484 = vdwg.mxu0
        %v485 = vxor.u32 %v481, 2147483648
        %v486 = vxor.u32 %v483, 2147483648
        %v487 = vmul.f32 %v485, 1.442695
        %v488 = vpow.pop %v487
        %v489 = vmul.f32 %v486, 1.442695
        %v490 = vpow.pop %v489
        %v491 = vadd.f32 %v488, 1.0
        %v492 = vadd.f32 %v490, 1.0
        %v493 = vrcp.pop %v491
        %v494 = vmul.f32 1.0, %v493
        %v495 = vrcp.pop %v492
        %v496 = vmul.f32 1.0, %v495
        %v499 = vcombine.low %v494, %v496
        %v501 = vunpack.c.l.s4 1966171168
        %v502 = vunpack.c.0.s8 %v501
        %v503 = vlaneseq
        %v504 = vshrl.u32 %v503, 7
        %v505 = vsub.s32 %v502, %v504
        %v506 = vrot.slane %v499, %v505
        %v508 = vunpack.c.l.s4 1966171168
        %v509 = vunpack.c.0.s8 %v508
        %v510 = vlaneseq
        %v511 = vshrl.u32 %v510, 7
        %v512 = vsub.s32 %v509, %v511
        %v513 = vrot.slane %v506, %v512
        %v515 = vlaneseq
        %vm516 = vcmp.ge.s32.totalorder %v515, 0
        %vm517 = vcmp.lt.s32.totalorder %v515, 256
        %vm518 = vmand %vm516, %vm517
        %519 = vst.msk [vmem:[%s176] sm:$0x3] %vm518, %v513
        %s520 = sand.u32 %s77, 1
        %s521 = scalar_lea.sflag [#allocation6], %s520
        %s522 = sand.u32 %s77, 1
        %s523 = smul.addr %s522, 2
        %s524 = scalar_lea.vmem [#allocation9], %s523
        // Predicated region
        $region37: #{tpu_custom_call.1} parent=27 // pred_check
          %p525 = pneg %p87
        $region38: #{tpu_custom_call.1} parent=27 // pred_check_branch
          %527 = sbr.rel (%p525) target = $region40
        $region39: #{tpu_custom_call.1} parent=27 // pred_region
          %s529 = ssub.s32 32, 32
          %530 = vsyncadd %s521, %s529
          %s531 = smul.addr %s22, 2
          %s532 = smul.addr %s531, 16
          %s533 = scalar_lea.hbm %s3, %s532
          %s535 = sshll.u32 %s524, 4
          %s536 = int_to_ptr.vmem [resolvable:$true] %s535
          %538 = dma.vmem_to_hbm [thread:$0]  %s536, 32, %s533, %s521
        $region40: #{tpu_custom_call.1} parent=27 // pred_fallthru
          _
      $region28: #{tpu_custom_call.1} parent=5 // pred_fallthru
        _
      %p539 = scmp.le.s32.totalorder 2, %s17
      // Predicated region
      $region41: #{tpu_custom_call.1} parent=5 // pred_check
        %p540 = pneg %p539
      $region42: #{tpu_custom_call.1} parent=5 // pred_check_branch
        %542 = sbr.rel (%p540) target = $region44
      $region43: #{tpu_custom_call.1} parent=5 // pred_region
        %s543 = ssub.s32 %s17, 2
        // Predicated region
        $region45: #{tpu_custom_call.1} parent=43 // pred_check
          %p544 = pneg %p93
        $region46: #{tpu_custom_call.1} parent=43 // pred_check_branch
          %546 = sbr.rel (%p544) target = $region48
        $region47: #{tpu_custom_call.1} parent=43 // pred_region
          %s547 = sand.u32 %s78, 1
          %s548 = scalar_lea.sflag [#allocation6], %s547
          %s549 = sand.u32 %s78, 1
          %s550 = smul.addr %s549, 2
          %s551 = scalar_lea.vmem [#allocation9], %s550
          %552 = dma.done %s548, 32
        $region48: #{tpu_custom_call.1} parent=43 // pred_fallthru
          _
      $region44: #{tpu_custom_call.1} parent=5 // pred_fallthru
        _
    $region6: #{tpu_custom_call.1} parent=1 // loop_footer
      %s21 = sadd.s32 1, %s17
    $region7: #{tpu_custom_call.1} parent=1 // loop_footer_branch
      %16 = sbr.rel target = $region3
    $region8: #{tpu_custom_call.1} parent=1 // loop_exit
      _
    %553 = vsyncpa [#allocation5], 1
    %s554 = scalar_lea.sflag [#allocation5], 1
    %555 = vsyncpa %s554, 1
    %556 = vsyncpa [#allocation8], 1
    %s557 = scalar_lea.sflag [#allocation8], 1
    %558 = vsyncpa %s557, 1
    %559 = vsyncpa [#allocation6], 1
    %s560 = scalar_lea.sflag [#allocation6], 1
    %561 = vsyncpa %s560, 1

</llo_original>
